<compile_context>
chip_gen: v6e
topology: v6e:2x2x1
jax: 0.10.0
libtpu: 0.0.40
codegen_flags: <defaults>
</compile_context>

<pallas_src>
import functools

import jax
import jax.numpy as jnp
from jax.experimental import pallas as pl
from jax.experimental.pallas import tpu as pltpu


# --------------------------------------------------------------------------- #
# Kernel
# --------------------------------------------------------------------------- #
def _avgpool_same_kernel(c_ref, x_ref, o_ref, *, H, W, R):
    """'Same' average pooling (stride=1, odd kernel 2R+1, pad R), pad excluded
    from the divisor.

    c_ref: (4R+1, H*W) f32 resident constants:
        rows 2(d-1), 2(d-1)+1        : left/right validity masks for shift d
        rows 2R+2(d-1), 2R+2(d-1)+1  : up/down validity masks for shift d
        row  4R                      : exact reciprocal 1/(cw*ch)
    x_ref / o_ref: (TN, H*W) with (H, W) flattened onto the lane axis.
    """
    L = H * W
    x = x_ref[...].astype(jnp.float32)                       # (TN, L)

    # ---- horizontal (along W) taps: lane rotations + precomputed masks ----
    rowsum = x
    for d in range(1, R + 1):
        left = pltpu.roll(x, shift=d, axis=1)                 # left[p]  = x[p - d]
        right = pltpu.roll(x, shift=L - d, axis=1)            # right[p] = x[p + d]
        lm = c_ref[pl.ds(2 * (d - 1), 1), :]                  # (1, L) 0/1 mask
        rm = c_ref[pl.ds(2 * (d - 1) + 1, 1), :]
        rowsum = rowsum + left * lm + right * rm

    # ---- vertical (along H) taps: rolls by multiples of W lanes ----
    acc = rowsum
    for d in range(1, R + 1):
        up = pltpu.roll(rowsum, shift=d * W, axis=1)          # rowsum[p - d*W]
        down = pltpu.roll(rowsum, shift=L - d * W, axis=1)    # rowsum[p + d*W]
        um = c_ref[pl.ds(2 * R + 2 * (d - 1), 1), :]
        dm = c_ref[pl.ds(2 * R + 2 * (d - 1) + 1, 1), :]
        acc = acc + up * um + down * dm

    # Exact count_include_pad=False divisor (precomputed reciprocal), one
    # broadcast multiply. Do NOT use pl.reciprocal(approx=True) here.
    inv = c_ref[pl.ds(4 * R, 1), :]
    o_ref[...] = (acc * inv).astype(o_ref.dtype)


# --------------------------------------------------------------------------- #
# Host-side helpers
# --------------------------------------------------------------------------- #
def _build_consts(H, W, R):
    """(4R+1, H*W) f32: border masks per shift distance + exact 1/(cw*ch)."""
    lane = jnp.arange(H * W, dtype=jnp.int32)
    w = lane % W
    h = lane // W
    rows = []
    cw = jnp.ones((H * W,), jnp.float32)
    ch = jnp.ones((H * W,), jnp.float32)
    for d in range(1, R + 1):
        lm = (w >= d).astype(jnp.float32)
        rm = (w < W - d).astype(jnp.float32)
        rows += [lm, rm]
        cw = cw + lm + rm
    for d in range(1, R + 1):
        um = (h >= d).astype(jnp.float32)
        dm = (h < H - d).astype(jnp.float32)
        rows += [um, dm]
        ch = ch + um + dm
    rows.append(1.0 / (cw * ch))
    return jnp.stack(rows, axis=0)                            # (4R+1, L)


def _ceil_div(a, b):
    return -(-a // b)


def _round_up(x, m):
    return _ceil_div(x, m) * m


def _vmem_limit_bytes():
    """Generation-aware scoped-VMEM request."""
    try:
        kind = jax.devices()[0].device_kind.lower()
    except Exception:
        kind = ""
    if "v5" in kind or "v6" in kind:
        return 96 * 1024 * 1024        # 128 MiB physical VMEM on v5e / v6e
    return 44 * 1024 * 1024            # conservative: v7x has 64 MiB per TensorCore


def _pick_tn(N, L, in_itemsize, out_itemsize, vmem_limit):
    """N-tile: sublane-packed, sized from ~0.55x of the VMEM limit, with at
    least 2 grid steps when splittable (megacore) and a preference for tiles
    that divide N exactly (no ragged tail block)."""
    pack = max(8, 32 // max(in_itemsize, 1))   # 8 (f32) / 16 (bf16) / 32 (int8)

    budget = int(0.55 * vmem_limit)
    # double-buffered in + out blocks, plus ~5 live f32 temporaries per row
    per_row = 2 * L * in_itemsize + 2 * L * out_itemsize + 5 * L * 4
    cap = max(pack, (budget // per_row) // pack * pack)

    if N <= pack:
        return N                                # single full-extent block

    steps = max(2, _ceil_div(N, cap))           # >=2 steps => v7x megacore shard
    tn = _round_up(_ceil_div(N, steps), pack)
    while tn > cap and steps * pack < N:
        steps += 1
        tn = _round_up(_ceil_div(N, steps), pack)
    tn = min(tn, _round_up(N, pack))

    # prefer a tn (not much smaller) that divides N exactly
    cand = tn
    while cand >= max(pack, tn // 2):
        if N % cand == 0:
            return cand
        cand -= pack
    return tn


# --------------------------------------------------------------------------- #
# Public wrapper
# --------------------------------------------------------------------------- #
def avgpool2d_pallas(x, kernel_size=3, padding=1):
    """nn.AvgPool2d(kernel_size, stride=1, padding, count_include_pad=False).

    Implements the 'same' configuration (odd kernel, padding == kernel_size//2),
    which is what POOLING(kernel_size=3) instantiates (stride=1, padding=1).
    """
    K, P = kernel_size, padding
    if K % 2 != 1 or P != K // 2:
        # TODO(synk): general (kernel_size, padding) with Ho != H not implemented.
        raise NotImplementedError("only odd kernel with padding == kernel_size//2")
    R = K // 2

    B, C, H, W = x.shape
    N, L = B * C, H * W
    # TODO(synk): for W >= 128 (multiple of 128) a (TN, H, W) block with
    # sublane rolls for the vertical taps would halve XLU work on v6e/v7x.
    xf = x.reshape(N, L)                        # (H, W) flattened onto lanes
    consts = _build_consts(H, W, R)             # (4R+1, L) f32, resident

    vmem_limit = _vmem_limit_bytes()
    tn = _pick_tn(N, L, x.dtype.itemsize, x.dtype.itemsize, vmem_limit)
    grid = (pl.cdiv(N, tn),)

    out = pl.pallas_call(
        functools.partial(_avgpool_same_kernel, H=H, W=W, R=R),
        out_shape=jax.ShapeDtypeStruct((N, L), x.dtype),
        grid_spec=pltpu.PrefetchScalarGridSpec(
            num_scalar_prefetch=0,
            grid=grid,
            in_specs=[
                pl.BlockSpec((4 * R + 1, L), lambda i: (0, 0)),   # resident consts
                pl.BlockSpec((tn, L), lambda i: (i, 0)),
            ],
            out_specs=pl.BlockSpec((tn, L), lambda i: (i, 0)),
        ),
        compiler_params=pltpu.CompilerParams(
            dimension_semantics=("parallel",),
            vmem_limit_bytes=vmem_limit,
        ),
    )(consts, xf)

    return out.reshape(B, C, H, W)


# --------------------------------------------------------------------------- #
# Pure-JAX reference
# --------------------------------------------------------------------------- #
def _avgpool2d_ref(x, kernel_size=3, padding=1):
    """AvgPool2d(stride=1, count_include_pad=False) reference."""
    B, C, H, W = x.shape
    K, P = kernel_size, padding
    Ho = H + 2 * P - K + 1
    Wo = W + 2 * P - K + 1
    xp = jnp.pad(x, ((0, 0), (0, 0), (P, P), (P, P)))
    mp = jnp.pad(jnp.ones_like(x), ((0, 0), (0, 0), (P, P), (P, P)))
    acc = jnp.zeros((B, C, Ho, Wo), jnp.float32)
    cnt = jnp.zeros((B, C, Ho, Wo), jnp.float32)
    for dy in range(K):
        for dx in range(K):
            acc = acc + xp[:, :, dy:dy + Ho, dx:dx + Wo].astype(jnp.float32)
            cnt = cnt + mp[:, :, dy:dy + Ho, dx:dx + Wo].astype(jnp.float32)
    return (acc / cnt).astype(x.dtype)


if __name__ == "__main__":
    key = jax.random.PRNGKey(0)
    # small NCHW input consistent with the module's forward
    x = jax.random.normal(key, (2, 4, 16, 16), dtype=jnp.float32)

    y = avgpool2d_pallas(x, kernel_size=3, padding=1)
    y = jax.block_until_ready(y)

    y_ref = _avgpool2d_ref(x, kernel_size=3, padding=1)
    assert y.shape == (2, 4, 16, 16)
    assert jnp.allclose(y, y_ref, atol=1e-5, rtol=1e-5)

    print("KERNEL_OK")
</pallas_src>

<mosaic_0001>
module attributes {stable_mosaic.version = 11 : i64} {
  func.func @_avgpool_same_kernel(%arg0: i32, %arg1: memref<5x256xf32, #tpu.memory_space<vmem>>, %arg2: memref<8x256xf32, #tpu.memory_space<vmem>>, %arg3: memref<8x256xf32, #tpu.memory_space<vmem>>) attributes {dimension_semantics = [#tpu.dimension_semantics<parallel>], iteration_bounds = array<i64: 1>, scalar_prefetch = 0 : i64, scratch_operands = 0 : i64, tpu.core_type = #tpu.core_type<tc>, window_params = [{pipeline_mode = #tpu.pipeline_mode<synchronous>, transform_indices = @transform_0, window_bounds = array<i64: 5, 256>}, {transform_indices = @transform_1, window_bounds = array<i64: 8, 256>}, {transform_indices = @transform_2, window_bounds = array<i64: 8, 256>}]} {
    %c0 = arith.constant 0 : index
    %c0_0 = arith.constant 0 : index
    %0 = vector.load %arg2[%c0, %c0_0] : memref<8x256xf32, #tpu.memory_space<vmem>>, vector<8x256xf32>
    %c1_i32 = arith.constant 1 : i32
    %1 = tpu.dynamic_rotate %0 by %c1_i32 dim 1 : vector<8x256xf32>, i32 -> vector<8x256xf32>
    %c255_i32 = arith.constant 255 : i32
    %2 = tpu.dynamic_rotate %0 by %c255_i32 dim 1 : vector<8x256xf32>, i32 -> vector<8x256xf32>
    %c0_1 = arith.constant 0 : index
    %c0_2 = arith.constant 0 : index
    %3 = vector.load %arg1[%c0_1, %c0_2] : memref<5x256xf32, #tpu.memory_space<vmem>>, vector<1x256xf32>
    %c1 = arith.constant 1 : index
    %c0_3 = arith.constant 0 : index
    %4 = vector.load %arg1[%c1, %c0_3] : memref<5x256xf32, #tpu.memory_space<vmem>>, vector<1x256xf32>
    %5 = vector.broadcast %3 : vector<1x256xf32> to vector<8x256xf32>
    %6 = arith.mulf %1, %5 : vector<8x256xf32>
    %7 = arith.addf %0, %6 : vector<8x256xf32>
    %8 = vector.broadcast %4 : vector<1x256xf32> to vector<8x256xf32>
    %9 = arith.mulf %2, %8 : vector<8x256xf32>
    %10 = arith.addf %7, %9 : vector<8x256xf32>
    %c16_i32 = arith.constant 16 : i32
    %11 = tpu.dynamic_rotate %10 by %c16_i32 dim 1 : vector<8x256xf32>, i32 -> vector<8x256xf32>
    %c240_i32 = arith.constant 240 : i32
    %12 = tpu.dynamic_rotate %10 by %c240_i32 dim 1 : vector<8x256xf32>, i32 -> vector<8x256xf32>
    %c2 = arith.constant 2 : index
    %c0_4 = arith.constant 0 : index
    %13 = vector.load %arg1[%c2, %c0_4] : memref<5x256xf32, #tpu.memory_space<vmem>>, vector<1x256xf32>
    %c3 = arith.constant 3 : index
    %c0_5 = arith.constant 0 : index
    %14 = vector.load %arg1[%c3, %c0_5] : memref<5x256xf32, #tpu.memory_space<vmem>>, vector<1x256xf32>
    %15 = vector.broadcast %13 : vector<1x256xf32> to vector<8x256xf32>
    %16 = arith.mulf %11, %15 : vector<8x256xf32>
    %17 = arith.addf %10, %16 : vector<8x256xf32>
    %18 = vector.broadcast %14 : vector<1x256xf32> to vector<8x256xf32>
    %19 = arith.mulf %12, %18 : vector<8x256xf32>
    %20 = arith.addf %17, %19 : vector<8x256xf32>
    %c4 = arith.constant 4 : index
    %c0_6 = arith.constant 0 : index
    %21 = vector.load %arg1[%c4, %c0_6] : memref<5x256xf32, #tpu.memory_space<vmem>>, vector<1x256xf32>
    %22 = vector.broadcast %21 : vector<1x256xf32> to vector<8x256xf32>
    %23 = arith.mulf %20, %22 : vector<8x256xf32>
    %c0_7 = arith.constant 0 : index
    %c0_8 = arith.constant 0 : index
    %24 = vector.load %arg3[%c0_7, %c0_8] : memref<8x256xf32, #tpu.memory_space<vmem>>, vector<8x256xf32>
    tpu.vector_store %arg3[%c0_7, %c0_8], %23 {strides = array<i32>} : memref<8x256xf32, #tpu.memory_space<vmem>>, vector<8x256xf32>,
    return
  }
  func.func @transform_0(%arg0: i32) -> (i32, i32) {
    %c0_i32 = arith.constant 0 : i32
    %c0_i32_0 = arith.constant 0 : i32
    %c0_i32_1 = arith.constant 0 : i32
    return %c0_i32, %c0_i32_0 : i32, i32
  }
  func.func @transform_1(%arg0: i32) -> (i32, i32) {
    %c0_i32 = arith.constant 0 : i32
    %c0_i32_0 = arith.constant 0 : i32
    return %arg0, %c0_i32 : i32, i32
  }
  func.func @transform_2(%arg0: i32) -> (i32, i32) {
    %c0_i32 = arith.constant 0 : i32
    %c0_i32_0 = arith.constant 0 : i32
    return %arg0, %c0_i32 : i32, i32
  }
}

</mosaic_0001>

<llo_original>
// kernel: tpu_custom_call.1
$region0: #{tpu_custom_call.1}
  #allocation0 [shape = 'u32[]', space=smem, size = 0x4, offset = 0x4, fixed_abs, tag = 'smem constant byte address 0x4 - core index']
  #allocation1 [shape = 'u32[144,128]{1,0:T(1,128)}', space=vmem, size = 0x12000, scoped, tag = 'internal scratch']
  %s0 = inlined_call_operand.hbm [shape: f32[5,256], index: 0, kind: input, shape index: {}]
  %s1 = inlined_call_operand.hbm [shape: f32[8,256], index: 1, kind: input, shape index: {}]
  %s2 = inlined_call_operand.hbm [shape: f32[8,256], index: 2, kind: output, shape index: {}]
  %s3 = sld [smem:[#allocation0]]
  $region26: #{tpu_custom_call.1} parent=0
    _
  %s5 = ssub.s32 1, %s3
  %s6 = scalar_select 0, %s5, %s3
  $region1: #{tpu_custom_call.1} parent=0
    #allocation2 [shape = 'u8[8192]{0}', space=vmem, size = 0x2000, scoped, tag = 'input window, operand 0, single buffered']
    #allocation3 [shape = 's32[1]{0}', space=sflag, size = 0x4, scoped, tag = 'scoped memory for tpu_custom_call.1']
    #allocation4 [shape = 's32[1]{0}', space=sflag, size = 0x4, scoped, tag = 'scoped memory for tpu_custom_call.1']
    #allocation5 [shape = 'u8[8192]{0}', space=vmem, size = 0x2000, scoped, tag = 'input window, operand 1, single buffered']
    #allocation6 [shape = 's32[1]{0}', space=sflag, size = 0x4, scoped, tag = 'scoped memory for tpu_custom_call.1']
    #allocation7 [shape = 'u8[8192]{0}', space=vmem, size = 0x2000, scoped, tag = 'output window, operand 0, single buffered']
    %7 = vsyncpa [#allocation3], 0
    %8 = vsyncpa [#allocation6], 0
    %9 = vsyncpa [#allocation4], 0
    // Predicated region
    $region2: #{tpu_custom_call.1} parent=1 // pred_check
      _
    $region3: #{tpu_custom_call.1} parent=1 // pred_check_branch
      %11 = sbr.rel (0) target = $region5
    $region4: #{tpu_custom_call.1} parent=1 // pred_region
      %s13 = ssub.s32 256, 256
      %14 = vsyncadd [#allocation3], %s13
      %s16 = sshll.u32 [#allocation2], 4
      %s17 = int_to_ptr.vmem [resolvable:$true] %s16
      %19 = dma.hbm_to_vmem [thread:$0]  %s0, 256, %s17, [#allocation3]
    $region5: #{tpu_custom_call.1} parent=1 // pred_fallthru
      _
    // Predicated region
    $region6: #{tpu_custom_call.1} parent=1 // pred_check
      _
    $region7: #{tpu_custom_call.1} parent=1 // pred_check_branch
      %21 = sbr.rel (0) target = $region9
    $region8: #{tpu_custom_call.1} parent=1 // pred_region
      %s23 = ssub.s32 256, 256
      %24 = vsyncadd [#allocation6], %s23
      %s26 = sshll.u32 [#allocation5], 4
      %s27 = int_to_ptr.vmem [resolvable:$true] %s26
      %29 = dma.hbm_to_vmem [thread:$0]  %s1, 256, %s27, [#allocation6]
    $region9: #{tpu_custom_call.1} parent=1 // pred_fallthru
      _
    // Predicated region
    $region10: #{tpu_custom_call.1} parent=1 // pred_check
      _
    $region11: #{tpu_custom_call.1} parent=1 // pred_check_branch
      %31 = sbr.rel (0) target = $region13
    $region12: #{tpu_custom_call.1} parent=1 // pred_region
      %32 = dma.done [#allocation3], 256
    $region13: #{tpu_custom_call.1} parent=1 // pred_fallthru
      _
    // Predicated region
    $region14: #{tpu_custom_call.1} parent=1 // pred_check
      _
    $region15: #{tpu_custom_call.1} parent=1 // pred_check_branch
      %34 = sbr.rel (0) target = $region17
    $region16: #{tpu_custom_call.1} parent=1 // pred_region
      %35 = dma.done [#allocation6], 256
    $region17: #{tpu_custom_call.1} parent=1 // pred_fallthru
      _
    %v36 = vld [vmem:[#allocation5] sm:$0xff]
    %v37 = vld [vmem:[#allocation5 + $0x8] sm:$0xff]
    %38 = vrot.lane.b32.xlu0 %v36, 1
    %v39 = vpop.permute.xlu0 %38
    %40 = vrot.lane.b32.xlu0 %v37, 1
    %v41 = vpop.permute.xlu0 %40
    %v42 = vlaneseq
    %v43 = vand.u32 %v42, 127
    %vm44 = vcmp.lt.s32.totalorder %v43, 1
    %v45 = vsel %vm44, %v39, %v41
    %v46 = vsel %vm44, %v41, %v39
    %47 = vrot.lane.b32.xlu0 %v36, 127
    %v48 = vpop.permute.xlu0 %47
    %49 = vrot.lane.b32.xlu0 %v37, 127
    %v50 = vpop.permute.xlu0 %49
    %vm51 = vcmp.lt.s32.totalorder %v43, 127
    %v52 = vsel %vm51, %v48, %v50
    %v53 = vsel %vm51, %v50, %v48
    %v54 = vld [vmem:[#allocation2] ss:$8 sm:$0x3]
    %s55 = scalar_lea.vmem [#allocation2], 1
    %v56 = vld [vmem:[%s55] ss:$8 sm:$0x3]
    %v58 = vlaneseq
    %v59 = vshrl.u32 %v58, 7
    %v60 = vsub.s32 0, %v59
    %v61 = vrot.slane %v54, %v60
    %v62 = vlaneseq
    %v63 = vshrl.u32 %v62, 7
    %v64 = vsub.s32 1, %v63
    %v65 = vrot.slane %v54, %v64
    %v68 = vmul.f32 %v46, %v61
    %v69 = vmul.f32 %v45, %v65
    %v70 = vadd.f32 %v36, %v68
    %v71 = vadd.f32 %v37, %v69
    %v73 = vlaneseq
    %v74 = vshrl.u32 %v73, 7
    %v75 = vsub.s32 0, %v74
    %v76 = vrot.slane %v56, %v75
    %v77 = vlaneseq
    %v78 = vshrl.u32 %v77, 7
    %v79 = vsub.s32 1, %v78
    %v80 = vrot.slane %v56, %v79
    %v83 = vmul.f32 %v52, %v76
    %v84 = vmul.f32 %v53, %v80
    %v85 = vadd.f32 %v70, %v83
    %v86 = vadd.f32 %v71, %v84
    %87 = vrot.lane.b32.xlu0 %v85, 16
    %v88 = vpop.permute.xlu0 %87
    %89 = vrot.lane.b32.xlu0 %v86, 16
    %v90 = vpop.permute.xlu0 %89
    %vm91 = vcmp.lt.s32.totalorder %v43, 16
    %v92 = vsel %vm91, %v88, %v90
    %v93 = vsel %vm91, %v90, %v88
    %94 = vrot.lane.b32.xlu0 %v85, 112
    %v95 = vpop.permute.xlu0 %94
    %96 = vrot.lane.b32.xlu0 %v86, 112
    %v97 = vpop.permute.xlu0 %96
    %vm98 = vcmp.lt.s32.totalorder %v43, 112
    %v99 = vsel %vm98, %v95, %v97
    %v100 = vsel %vm98, %v97, %v95
    %s101 = scalar_lea.vmem [#allocation2], 2
    %v102 = vld [vmem:[%s101] ss:$8 sm:$0x3]
    %s103 = scalar_lea.vmem [#allocation2], 3
    %v104 = vld [vmem:[%s103] ss:$8 sm:$0x3]
    %v106 = vlaneseq
    %v107 = vshrl.u32 %v106, 7
    %v108 = vsub.s32 0, %v107
    %v109 = vrot.slane %v102, %v108
    %v110 = vlaneseq
    %v111 = vshrl.u32 %v110, 7
    %v112 = vsub.s32 1, %v111
    %v113 = vrot.slane %v102, %v112
    %v116 = vmul.f32 %v93, %v109
    %v117 = vmul.f32 %v92, %v113
    %v118 = vadd.f32 %v85, %v116
    %v119 = vadd.f32 %v86, %v117
    %v121 = vlaneseq
    %v122 = vshrl.u32 %v121, 7
    %v123 = vsub.s32 0, %v122
    %v124 = vrot.slane %v104, %v123
    %v125 = vlaneseq
    %v126 = vshrl.u32 %v125, 7
    %v127 = vsub.s32 1, %v126
    %v128 = vrot.slane %v104, %v127
    %v131 = vmul.f32 %v99, %v124
    %v132 = vmul.f32 %v100, %v128
    %v133 = vadd.f32 %v118, %v131
    %v134 = vadd.f32 %v119, %v132
    %s135 = scalar_lea.vmem [#allocation2], 4
    %v136 = vld [vmem:[%s135] ss:$8 sm:$0x3]
    %v138 = vlaneseq
    %v139 = vshrl.u32 %v138, 7
    %v140 = vsub.s32 0, %v139
    %v141 = vrot.slane %v136, %v140
    %v142 = vlaneseq
    %v143 = vshrl.u32 %v142, 7
    %v144 = vsub.s32 1, %v143
    %v145 = vrot.slane %v136, %v144
    %v148 = vmul.f32 %v133, %v141
    %v149 = vmul.f32 %v134, %v145
    %150 = vst [vmem:[#allocation7] sm:$0xff] %v148
    %151 = vst [vmem:[#allocation7 + $0x8] sm:$0xff] %v149
    // Predicated region
    $region18: #{tpu_custom_call.1} parent=1 // pred_check
      _
    $region19: #{tpu_custom_call.1} parent=1 // pred_check_branch
      %153 = sbr.rel (0) target = $region21
    $region20: #{tpu_custom_call.1} parent=1 // pred_region
      %s155 = ssub.s32 256, 256
      %156 = vsyncadd [#allocation4], %s155
      %s158 = sshll.u32 [#allocation7], 4
      %s159 = int_to_ptr.vmem [resolvable:$true] %s158
      %161 = dma.vmem_to_hbm [thread:$0]  %s159, 256, %s2, [#allocation4]
    $region21: #{tpu_custom_call.1} parent=1 // pred_fallthru
      _
    // Predicated region
    $region22: #{tpu_custom_call.1} parent=1 // pred_check
      _
    $region23: #{tpu_custom_call.1} parent=1 // pred_check_branch
      %163 = sbr.rel (0) target = $region25
    $region24: #{tpu_custom_call.1} parent=1 // pred_region
      %164 = dma.done [#allocation4], 256
    $region25: #{tpu_custom_call.1} parent=1 // pred_fallthru
      _
    %165 = vsyncpa [#allocation3], 1
    %166 = vsyncpa [#allocation6], 1
    %167 = vsyncpa [#allocation4], 1

</llo_original>
